<compile_context>
chip_gen: v5e
topology: v5e:2x2
jax: 0.10.0
libtpu: 0.0.40
codegen_flags: <defaults>
</compile_context>

<pallas_src>
import functools

import jax
import jax.numpy as jnp
from jax.experimental import pallas as pl
from jax.experimental.pallas import tpu as pltpu


def _round_up(a: int, m: int) -> int:
    return ((a + m - 1) // m) * m


def policy_net_kernel(x_ref, w1_ref, b1_ref, w2_ref, b2_ref, w3_ref, b3_ref, o_ref):
    # Layer 1: Linear + ReLU (MXU matmul with f32 accumulation, VPU max in f32)
    h1 = jnp.dot(x_ref[...], w1_ref[...], preferred_element_type=jnp.float32)
    h1 = jnp.maximum(h1 + b1_ref[...], 0.0)

    # Layer 2: Linear + ReLU
    h2 = jnp.dot(h1.astype(w2_ref.dtype), w2_ref[...],
                 preferred_element_type=jnp.float32)
    h2 = jnp.maximum(h2 + b2_ref[...], 0.0)

    # Layer 3: Linear.  Padded output lanes carry b3 = -1e30 so they vanish in softmax.
    logits = jnp.dot(h2.astype(w3_ref.dtype), w3_ref[...],
                     preferred_element_type=jnp.float32)
    logits = logits + b3_ref[...]

    # Numerically-stable softmax over the (lane-dense, padded) last axis.
    m = jnp.max(logits, axis=-1, keepdims=True)
    e = jnp.exp(logits - m)
    denom = jnp.sum(e, axis=-1, keepdims=True)
    o_ref[...] = (e * pl.reciprocal(denom, approx=True)).astype(o_ref.dtype)


@functools.partial(jax.jit, static_argnames=("tile_b", "use_bf16"))
def policy_network_forward(x, params, *, tile_b: int = 512, use_bf16: bool = True):
    """x: (B, input_size) float32. params: dict of w1,b1,w2,b2,w3,b3 (w: (in,out))."""
    LANE, SUB = 128, 8
    B, K = x.shape
    H = params["w1"].shape[1]
    N = params["w3"].shape[1]

    K_pad = _round_up(max(K, LANE), LANE)
    N_pad = _round_up(max(N, LANE), LANE)
    TB = min(tile_b, _round_up(B, SUB))
    B_pad = _round_up(B, TB)

    mm_dtype = jnp.bfloat16 if use_bf16 else jnp.float32

    # Pad batch rows / feature lanes with zeros (zeros contribute nothing to matmuls).
    xp = jnp.zeros((B_pad, K_pad), mm_dtype).at[:B, :K].set(x.astype(mm_dtype))
    w1 = jnp.zeros((K_pad, H), mm_dtype).at[:K, :].set(params["w1"].astype(mm_dtype))
    w2 = params["w2"].astype(mm_dtype)
    w3 = jnp.zeros((H, N_pad), mm_dtype).at[:, :N].set(params["w3"].astype(mm_dtype))
    b1 = params["b1"].astype(jnp.float32)                       # (1, H)
    b2 = params["b2"].astype(jnp.float32)                       # (1, H)
    # Padded output lanes get a huge negative bias -> exp(...) == 0 in softmax.
    b3 = jnp.full((1, N_pad), -1e30, jnp.float32).at[:, :N].set(
        params["b3"].astype(jnp.float32))

    grid = (B_pad // TB,)

    out_padded = pl.pallas_call(
        policy_net_kernel,
        out_shape=jax.ShapeDtypeStruct((B_pad, N_pad), jnp.float32),
        grid_spec=pltpu.PrefetchScalarGridSpec(
            num_scalar_prefetch=0,
            grid=grid,
            in_specs=[
                pl.BlockSpec((TB, K_pad), lambda i: (i, 0)),   # x tile (pipelined)
                pl.BlockSpec((K_pad, H), lambda i: (0, 0)),    # w1 (resident)
                pl.BlockSpec((1, H), lambda i: (0, 0)),        # b1
                pl.BlockSpec((H, H), lambda i: (0, 0)),        # w2
                pl.BlockSpec((1, H), lambda i: (0, 0)),        # b2
                pl.BlockSpec((H, N_pad), lambda i: (0, 0)),    # w3
                pl.BlockSpec((1, N_pad), lambda i: (0, 0)),    # b3
            ],
            out_specs=pl.BlockSpec((TB, N_pad), lambda i: (i, 0)),
        ),
        compiler_params=pltpu.CompilerParams(
            dimension_semantics=("parallel",),
        ),
    )(xp, w1, b1, w2, b2, w3, b3)

    return out_padded[:B, :N]


def policy_network_ref(x, params):
    """Pure-JAX f32 reference matching the PyTorch module."""
    h1 = jnp.maximum(x @ params["w1"] + params["b1"], 0.0)
    h2 = jnp.maximum(h1 @ params["w2"] + params["b2"], 0.0)
    logits = h2 @ params["w3"] + params["b3"]
    return jax.nn.softmax(logits, axis=-1)


def init_params(key, input_size, output_size, hidden=128):
    """Mirrors PyTorch nn.Linear default init: U(-1/sqrt(fan_in), 1/sqrt(fan_in))."""
    ks = jax.random.split(key, 6)

    def linear(kw, kb, fan_in, fan_out):
        bound = 1.0 / jnp.sqrt(fan_in)
        w = jax.random.uniform(kw, (fan_in, fan_out), jnp.float32, -bound, bound)
        b = jax.random.uniform(kb, (1, fan_out), jnp.float32, -bound, bound)
        return w, b

    w1, b1 = linear(ks[0], ks[1], input_size, hidden)
    w2, b2 = linear(ks[2], ks[3], hidden, hidden)
    w3, b3 = linear(ks[4], ks[5], hidden, output_size)
    return {"w1": w1, "b1": b1, "w2": w2, "b2": b2, "w3": w3, "b3": b3}


if __name__ == "__main__":
    key = jax.random.PRNGKey(0)
    k_params, k_x_small, k_x_big = jax.random.split(key, 3)

    input_size = 32
    output_size = 8
    params = init_params(k_params, input_size, output_size)

    # Small case (single tile, grid=(1,)).
    x_small = jax.random.normal(k_x_small, (8, input_size), jnp.float32)
    out_small = jax.block_until_ready(policy_network_forward(x_small, params))
    ref_small = policy_network_ref(x_small, params)

    assert out_small.shape == (8, output_size)
    assert bool(jnp.all(jnp.abs(jnp.sum(out_small, axis=-1) - 1.0) < 5e-3))
    assert bool(jnp.max(jnp.abs(out_small - ref_small)) < 5e-2)

    # Larger batch exercising the multi-tile pipelined grid (TB=512, grid=(2,)).
    x_big = jax.random.normal(k_x_big, (1024, input_size), jnp.float32)
    out_big = jax.block_until_ready(policy_network_forward(x_big, params))
    ref_big = policy_network_ref(x_big, params)

    assert out_big.shape == (1024, output_size)
    assert bool(jnp.all(jnp.abs(jnp.sum(out_big, axis=-1) - 1.0) < 5e-3))
    assert bool(jnp.max(jnp.abs(out_big - ref_big)) < 5e-2)

    print("KERNEL_OK")
</pallas_src>

<mosaic_0001>
module attributes {stable_mosaic.version = 11 : i64} {
  func.func @policy_net_kernel(%arg0: i32, %arg1: memref<8x128xbf16, #tpu.memory_space<vmem>>, %arg2: memref<128x128xbf16, #tpu.memory_space<vmem>>, %arg3: memref<1x128xf32, #tpu.memory_space<vmem>>, %arg4: memref<128x128xbf16, #tpu.memory_space<vmem>>, %arg5: memref<1x128xf32, #tpu.memory_space<vmem>>, %arg6: memref<128x128xbf16, #tpu.memory_space<vmem>>, %arg7: memref<1x128xf32, #tpu.memory_space<vmem>>, %arg8: memref<8x128xf32, #tpu.memory_space<vmem>>) attributes {dimension_semantics = [#tpu.dimension_semantics<parallel>], iteration_bounds = array<i64: 1>, scalar_prefetch = 0 : i64, scratch_operands = 0 : i64, tpu.core_type = #tpu.core_type<tc>, window_params = [{transform_indices = @transform_0, window_bounds = array<i64: 8, 128>}, {pipeline_mode = #tpu.pipeline_mode<synchronous>, transform_indices = @transform_1, window_bounds = array<i64: 128, 128>}, {pipeline_mode = #tpu.pipeline_mode<synchronous>, transform_indices = @transform_2, window_bounds = array<i64: 1, 128>}, {pipeline_mode = #tpu.pipeline_mode<synchronous>, transform_indices = @transform_3, window_bounds = array<i64: 128, 128>}, {pipeline_mode = #tpu.pipeline_mode<synchronous>, transform_indices = @transform_4, window_bounds = array<i64: 1, 128>}, {pipeline_mode = #tpu.pipeline_mode<synchronous>, transform_indices = @transform_5, window_bounds = array<i64: 128, 128>}, {pipeline_mode = #tpu.pipeline_mode<synchronous>, transform_indices = @transform_6, window_bounds = array<i64: 1, 128>}, {transform_indices = @transform_7, window_bounds = array<i64: 8, 128>}]} {
    %c0 = arith.constant 0 : index
    %c0_0 = arith.constant 0 : index
    %0 = vector.load %arg1[%c0, %c0_0] : memref<8x128xbf16, #tpu.memory_space<vmem>>, vector<8x128xbf16>
    %c0_1 = arith.constant 0 : index
    %c0_2 = arith.constant 0 : index
    %1 = vector.load %arg2[%c0_1, %c0_2] : memref<128x128xbf16, #tpu.memory_space<vmem>>, vector<128x128xbf16>
    %cst = arith.constant dense<0.000000e+00> : vector<8x128xf32>
    %2 = tpu.matmul %0, %1, %cst {dimension_numbers = #tpu.dot_dimension_numbers<[1], [0], [0], [1], [0, 0, 1, 1], [], []>} : vector<8x128xbf16>, vector<128x128xbf16>, vector<8x128xf32> -> vector<8x128xf32>
    %c0_3 = arith.constant 0 : index
    %c0_4 = arith.constant 0 : index
    %3 = vector.load %arg3[%c0_3, %c0_4] : memref<1x128xf32, #tpu.memory_space<vmem>>, vector<1x128xf32>
    %4 = vector.broadcast %3 : vector<1x128xf32> to vector<8x128xf32>
    %5 = arith.addf %2, %4 : vector<8x128xf32>
    %cst_5 = arith.constant 0.000000e+00 : f32
    %6 = vector.broadcast %cst_5 : f32 to vector<8x128xf32>
    %7 = arith.maximumf %5, %6 : vector<8x128xf32>
    %8 = arith.truncf %7 : vector<8x128xf32> to vector<8x128xbf16>
    %c0_6 = arith.constant 0 : index
    %c0_7 = arith.constant 0 : index
    %9 = vector.load %arg4[%c0_6, %c0_7] : memref<128x128xbf16, #tpu.memory_space<vmem>>, vector<128x128xbf16>
    %cst_8 = arith.constant dense<0.000000e+00> : vector<8x128xf32>
    %10 = tpu.matmul %8, %9, %cst_8 {dimension_numbers = #tpu.dot_dimension_numbers<[1], [0], [0], [1], [0, 0, 1, 1], [], []>} : vector<8x128xbf16>, vector<128x128xbf16>, vector<8x128xf32> -> vector<8x128xf32>
    %c0_9 = arith.constant 0 : index
    %c0_10 = arith.constant 0 : index
    %11 = vector.load %arg5[%c0_9, %c0_10] : memref<1x128xf32, #tpu.memory_space<vmem>>, vector<1x128xf32>
    %12 = vector.broadcast %11 : vector<1x128xf32> to vector<8x128xf32>
    %13 = arith.addf %10, %12 : vector<8x128xf32>
    %cst_11 = arith.constant 0.000000e+00 : f32
    %14 = vector.broadcast %cst_11 : f32 to vector<8x128xf32>
    %15 = arith.maximumf %13, %14 : vector<8x128xf32>
    %16 = arith.truncf %15 : vector<8x128xf32> to vector<8x128xbf16>
    %c0_12 = arith.constant 0 : index
    %c0_13 = arith.constant 0 : index
    %17 = vector.load %arg6[%c0_12, %c0_13] : memref<128x128xbf16, #tpu.memory_space<vmem>>, vector<128x128xbf16>
    %cst_14 = arith.constant dense<0.000000e+00> : vector<8x128xf32>
    %18 = tpu.matmul %16, %17, %cst_14 {dimension_numbers = #tpu.dot_dimension_numbers<[1], [0], [0], [1], [0, 0, 1, 1], [], []>} : vector<8x128xbf16>, vector<128x128xbf16>, vector<8x128xf32> -> vector<8x128xf32>
    %c0_15 = arith.constant 0 : index
    %c0_16 = arith.constant 0 : index
    %19 = vector.load %arg7[%c0_15, %c0_16] : memref<1x128xf32, #tpu.memory_space<vmem>>, vector<1x128xf32>
    %20 = vector.broadcast %19 : vector<1x128xf32> to vector<8x128xf32>
    %21 = arith.addf %18, %20 : vector<8x128xf32>
    %cst_17 = arith.constant dense<0xFF800000> : vector<8xf32>
    %22 = vector.multi_reduction <maximumf>, %21, %cst_17 [1] : vector<8x128xf32> to vector<8xf32>
    %23 = vector.shape_cast %22 : vector<8xf32> to vector<8x1xf32>
    %24 = vector.broadcast %23 : vector<8x1xf32> to vector<8x128xf32>
    %25 = arith.subf %21, %24 : vector<8x128xf32>
    %26 = math.exp %25 : vector<8x128xf32>
    %cst_18 = arith.constant dense<0.000000e+00> : vector<8xf32>
    %27 = vector.multi_reduction <add>, %26, %cst_18 [1] : vector<8x128xf32> to vector<8xf32>
    %28 = vector.shape_cast %27 : vector<8xf32> to vector<8x1xf32>
    %29 = tpu.reciprocal %28 {approx = true} : vector<8x1xf32> -> vector<8x1xf32>
    %30 = vector.broadcast %29 : vector<8x1xf32> to vector<8x128xf32>
    %31 = arith.mulf %26, %30 : vector<8x128xf32>
    %c0_19 = arith.constant 0 : index
    %c0_20 = arith.constant 0 : index
    %32 = vector.load %arg8[%c0_19, %c0_20] : memref<8x128xf32, #tpu.memory_space<vmem>>, vector<8x128xf32>
    tpu.vector_store %arg8[%c0_19, %c0_20], %31 {strides = array<i32>} : memref<8x128xf32, #tpu.memory_space<vmem>>, vector<8x128xf32>,
    return
  }
  func.func @transform_0(%arg0: i32) -> (i32, i32) {
    %c0_i32 = arith.constant 0 : i32
    %c0_i32_0 = arith.constant 0 : i32
    return %arg0, %c0_i32 : i32, i32
  }
  func.func @transform_1(%arg0: i32) -> (i32, i32) {
    %c0_i32 = arith.constant 0 : i32
    %c0_i32_0 = arith.constant 0 : i32
    %c0_i32_1 = arith.constant 0 : i32
    return %c0_i32, %c0_i32_0 : i32, i32
  }
  func.func @transform_2(%arg0: i32) -> (i32, i32) {
    %c0_i32 = arith.constant 0 : i32
    %c0_i32_0 = arith.constant 0 : i32
    %c0_i32_1 = arith.constant 0 : i32
    return %c0_i32, %c0_i32_0 : i32, i32
  }
  func.func @transform_3(%arg0: i32) -> (i32, i32) {
    %c0_i32 = arith.constant 0 : i32
    %c0_i32_0 = arith.constant 0 : i32
    %c0_i32_1 = arith.constant 0 : i32
    return %c0_i32, %c0_i32_0 : i32, i32
  }
  func.func @transform_4(%arg0: i32) -> (i32, i32) {
    %c0_i32 = arith.constant 0 : i32
    %c0_i32_0 = arith.constant 0 : i32
    %c0_i32_1 = arith.constant 0 : i32
    return %c0_i32, %c0_i32_0 : i32, i32
  }
  func.func @transform_5(%arg0: i32) -> (i32, i32) {
    %c0_i32 = arith.constant 0 : i32
    %c0_i32_0 = arith.constant 0 : i32
    %c0_i32_1 = arith.constant 0 : i32
    return %c0_i32, %c0_i32_0 : i32, i32
  }
  func.func @transform_6(%arg0: i32) -> (i32, i32) {
    %c0_i32 = arith.constant 0 : i32
    %c0_i32_0 = arith.constant 0 : i32
    %c0_i32_1 = arith.constant 0 : i32
    return %c0_i32, %c0_i32_0 : i32, i32
  }
  func.func @transform_7(%arg0: i32) -> (i32, i32) {
    %c0_i32 = arith.constant 0 : i32
    %c0_i32_0 = arith.constant 0 : i32
    return %arg0, %c0_i32 : i32, i32
  }
}

</mosaic_0001>

<llo_original>
// kernel: policy_network_forward.1
$region0: #{policy_network_forward.1}
  #allocation0 [shape = 'u32[]', space=smem, size = 0x4, offset = 0x4, fixed_abs, tag = 'smem constant byte address 0x4 - core index']
  #allocation1 [shape = 'u32[72,128]{1,0:T(1,128)}', space=vmem, size = 0x9000, scoped, tag = 'internal scratch']
  %s0 = inlined_call_operand.vmem [shape: bf16[8,128], index: 0, kind: input, shape index: {}]
  %s1 = inlined_call_operand.vmem [shape: bf16[128,128], index: 1, kind: input, shape index: {}]
  %s2 = inlined_call_operand.vmem [shape: f32[1,128], index: 2, kind: input, shape index: {}]
  %s3 = inlined_call_operand.vmem [shape: bf16[128,128], index: 3, kind: input, shape index: {}]
  %s4 = inlined_call_operand.vmem [shape: f32[1,128], index: 4, kind: input, shape index: {}]
  %s5 = inlined_call_operand.vmem [shape: bf16[128,128], index: 5, kind: input, shape index: {}]
  %s6 = inlined_call_operand.vmem [shape: f32[1,128], index: 6, kind: input, shape index: {}]
  %s7 = inlined_call_operand.hbm [shape: f32[8,128], index: 7, kind: output, shape index: {}]
  %s8 = sld [smem:[#allocation0]]
  $region38: #{policy_network_forward.1} parent=0
    _
  %s10 = ssub.s32 1, %s8
  %s11 = scalar_select 0, %s10, %s8
  $region1: #{policy_network_forward.1} parent=0
    #allocation2 [shape = 'u8[4096]{0}', space=vmem, size = 0x1000, scoped, tag = 'output window, operand 0, single buffered']
    #allocation3 [shape = 's32[1]{0}', space=sflag, size = 0x4, scoped, tag = 'scoped memory for policy_network_forward.1']
    %12 = vsyncpa [#allocation3], 0
    // Predicated region
    $region2: #{policy_network_forward.1} parent=1 // pred_check
      _
    $region3: #{policy_network_forward.1} parent=1 // pred_check_branch
      %14 = sbr.rel (0) target = $region5
    $region4: #{policy_network_forward.1} parent=1 // pred_region
      _
    $region5: #{policy_network_forward.1} parent=1 // pred_fallthru
      _
    // Predicated region
    $region6: #{policy_network_forward.1} parent=1 // pred_check
      _
    $region7: #{policy_network_forward.1} parent=1 // pred_check_branch
      %16 = sbr.rel (0) target = $region9
    $region8: #{policy_network_forward.1} parent=1 // pred_region
      _
    $region9: #{policy_network_forward.1} parent=1 // pred_fallthru
      _
    // Predicated region
    $region10: #{policy_network_forward.1} parent=1 // pred_check
      _
    $region11: #{policy_network_forward.1} parent=1 // pred_check_branch
      %18 = sbr.rel (0) target = $region13
    $region12: #{policy_network_forward.1} parent=1 // pred_region
      _
    $region13: #{policy_network_forward.1} parent=1 // pred_fallthru
      _
    // Predicated region
    $region14: #{policy_network_forward.1} parent=1 // pred_check
      _
    $region15: #{policy_network_forward.1} parent=1 // pred_check_branch
      %20 = sbr.rel (0) target = $region17
    $region16: #{policy_network_forward.1} parent=1 // pred_region
      _
    $region17: #{policy_network_forward.1} parent=1 // pred_fallthru
      _
    // Predicated region
    $region18: #{policy_network_forward.1} parent=1 // pred_check
      _
    $region19: #{policy_network_forward.1} parent=1 // pred_check_branch
      %22 = sbr.rel (0) target = $region21
    $region20: #{policy_network_forward.1} parent=1 // pred_region
      _
    $region21: #{policy_network_forward.1} parent=1 // pred_fallthru
      _
    // Predicated region
    $region22: #{policy_network_forward.1} parent=1 // pred_check
      _
    $region23: #{policy_network_forward.1} parent=1 // pred_check_branch
      %24 = sbr.rel (0) target = $region25
    $region24: #{policy_network_forward.1} parent=1 // pred_region
      _
    $region25: #{policy_network_forward.1} parent=1 // pred_fallthru
      _
    // Predicated region
    $region26: #{policy_network_forward.1} parent=1 // pred_check
      _
    $region27: #{policy_network_forward.1} parent=1 // pred_check_branch
      %26 = sbr.rel (0) target = $region29
    $region28: #{policy_network_forward.1} parent=1 // pred_region
      _
    $region29: #{policy_network_forward.1} parent=1 // pred_fallthru
      _
    %v27 = vld [vmem:[%s0] sm:$0xf]
    %v28 = vld [vmem:[%s1] sm:$0xf]
    %v29 = vld [vmem:[%s1 + $0x4] sm:$0xf]
    %v30 = vld [vmem:[%s1 + $0x8] sm:$0xf]
    %v31 = vld [vmem:[%s1 + $0xc] sm:$0xf]
    %v32 = vld [vmem:[%s1 + $0x10] sm:$0xf]
    %v33 = vld [vmem:[%s1 + $0x14] sm:$0xf]
    %v34 = vld [vmem:[%s1 + $0x18] sm:$0xf]
    %v35 = vld [vmem:[%s1 + $0x1c] sm:$0xf]
    %v36 = vld [vmem:[%s1 + $0x20] sm:$0xf]
    %v37 = vld [vmem:[%s1 + $0x24] sm:$0xf]
    %v38 = vld [vmem:[%s1 + $0x28] sm:$0xf]
    %v39 = vld [vmem:[%s1 + $0x2c] sm:$0xf]
    %v40 = vld [vmem:[%s1 + $0x30] sm:$0xf]
    %v41 = vld [vmem:[%s1 + $0x34] sm:$0xf]
    %v42 = vld [vmem:[%s1 + $0x38] sm:$0xf]
    %v43 = vld [vmem:[%s1 + $0x3c] sm:$0xf]
    %v44 = vld [vmem:[%s2] sm:$0x1]
    %v46 = vperm.slane %v44, 0
    %v64 = vunpack.c.l.b16 %v28
    %v65 = vunpack.c.l.b16 %v29
    %v66 = vunpack.c.l.b16 %v30
    %v67 = vunpack.c.l.b16 %v31
    %v68 = vunpack.c.l.b16 %v32
    %v69 = vunpack.c.l.b16 %v33
    %v70 = vunpack.c.l.b16 %v34
    %v71 = vunpack.c.l.b16 %v35
    %v72 = vunpack.c.l.b16 %v36
    %v73 = vunpack.c.l.b16 %v37
    %v74 = vunpack.c.l.b16 %v38
    %v75 = vunpack.c.l.b16 %v39
    %v76 = vunpack.c.l.b16 %v40
    %v77 = vunpack.c.l.b16 %v41
    %v78 = vunpack.c.l.b16 %v42
    %v79 = vunpack.c.l.b16 %v43
    %v80 = vpack.c.b16 %v65, %v64
    %v81 = vpack.c.b16 %v67, %v66
    %v82 = vpack.c.b16 %v69, %v68
    %v83 = vpack.c.b16 %v71, %v70
    %v84 = vpack.c.b16 %v73, %v72
    %v85 = vpack.c.b16 %v75, %v74
    %v86 = vpack.c.b16 %v77, %v76
    %v87 = vpack.c.b16 %v79, %v78
    %96 = vmatpush.bf16.msra.mxu0 %v87
    %97 = vmatpush.bf16.msra.mxu0 %v86
    %98 = vmatpush.bf16.msra.mxu0 %v85
    %99 = vmatpush.bf16.msra.mxu0 %v84
    %100 = vmatpush.bf16.msra.mxu0 %v83
    %101 = vmatpush.bf16.msra.mxu0 %v82
    %102 = vmatpush.bf16.msra.mxu0 %v81
    %103 = vmatpush.bf16.msra.mxu0 %v80
    %104 = vmatmul.bf16.gmra.mxu0 %v27
    %v105 = vpop.f32.mrf.mxu0
    %v106 = vadd.f32 %v46, %v105
    %v107 = vpop.f32.mrf.mxu0
    %108 = vdwg.mxu0
    %v109 = vmax.f32 %v106, 0.0
    %v110 = vpack.c.bf16 %v109, %v109
    %v111 = vld [vmem:[%s3] sm:$0xf]
    %v112 = vld [vmem:[%s3 + $0x4] sm:$0xf]
    %v113 = vld [vmem:[%s3 + $0x8] sm:$0xf]
    %v114 = vld [vmem:[%s3 + $0xc] sm:$0xf]
    %v115 = vld [vmem:[%s3 + $0x10] sm:$0xf]
    %v116 = vld [vmem:[%s3 + $0x14] sm:$0xf]
    %v117 = vld [vmem:[%s3 + $0x18] sm:$0xf]
    %v118 = vld [vmem:[%s3 + $0x1c] sm:$0xf]
    %v119 = vld [vmem:[%s3 + $0x20] sm:$0xf]
    %v120 = vld [vmem:[%s3 + $0x24] sm:$0xf]
    %v121 = vld [vmem:[%s3 + $0x28] sm:$0xf]
    %v122 = vld [vmem:[%s3 + $0x2c] sm:$0xf]
    %v123 = vld [vmem:[%s3 + $0x30] sm:$0xf]
    %v124 = vld [vmem:[%s3 + $0x34] sm:$0xf]
    %v125 = vld [vmem:[%s3 + $0x38] sm:$0xf]
    %v126 = vld [vmem:[%s3 + $0x3c] sm:$0xf]
    %v127 = vld [vmem:[%s4] sm:$0x1]
    %v129 = vperm.slane %v127, 0
    %v147 = vunpack.c.l.b16 %v111
    %v148 = vunpack.c.l.b16 %v112
    %v149 = vunpack.c.l.b16 %v113
    %v150 = vunpack.c.l.b16 %v114
    %v151 = vunpack.c.l.b16 %v115
    %v152 = vunpack.c.l.b16 %v116
    %v153 = vunpack.c.l.b16 %v117
    %v154 = vunpack.c.l.b16 %v118
    %v155 = vunpack.c.l.b16 %v119
    %v156 = vunpack.c.l.b16 %v120
    %v157 = vunpack.c.l.b16 %v121
    %v158 = vunpack.c.l.b16 %v122
    %v159 = vunpack.c.l.b16 %v123
    %v160 = vunpack.c.l.b16 %v124
    %v161 = vunpack.c.l.b16 %v125
    %v162 = vunpack.c.l.b16 %v126
    %v163 = vpack.c.b16 %v148, %v147
    %v164 = vpack.c.b16 %v150, %v149
    %v165 = vpack.c.b16 %v152, %v151
    %v166 = vpack.c.b16 %v154, %v153
    %v167 = vpack.c.b16 %v156, %v155
    %v168 = vpack.c.b16 %v158, %v157
    %v169 = vpack.c.b16 %v160, %v159
    %v170 = vpack.c.b16 %v162, %v161
    %179 = vmatpush.bf16.msra.mxu0 %v170
    %180 = vmatpush.bf16.msra.mxu0 %v169
    %181 = vmatpush.bf16.msra.mxu0 %v168
    %182 = vmatpush.bf16.msra.mxu0 %v167
    %183 = vmatpush.bf16.msra.mxu0 %v166
    %184 = vmatpush.bf16.msra.mxu0 %v165
    %185 = vmatpush.bf16.msra.mxu0 %v164
    %186 = vmatpush.bf16.msra.mxu0 %v163
    %187 = vmatmul.bf16.gmra.mxu0 %v110
    %v188 = vpop.f32.mrf.mxu0
    %v189 = vadd.f32 %v129, %v188
    %v190 = vpop.f32.mrf.mxu0
    %191 = vdwg.mxu0
    %v192 = vmax.f32 %v189, 0.0
    %v193 = vpack.c.bf16 %v192, %v192
    %v194 = vld [vmem:[%s5] sm:$0xf]
    %v195 = vld [vmem:[%s5 + $0x4] sm:$0xf]
    %v196 = vld [vmem:[%s5 + $0x8] sm:$0xf]
    %v197 = vld [vmem:[%s5 + $0xc] sm:$0xf]
    %v198 = vld [vmem:[%s5 + $0x10] sm:$0xf]
    %v199 = vld [vmem:[%s5 + $0x14] sm:$0xf]
    %v200 = vld [vmem:[%s5 + $0x18] sm:$0xf]
    %v201 = vld [vmem:[%s5 + $0x1c] sm:$0xf]
    %v202 = vld [vmem:[%s5 + $0x20] sm:$0xf]
    %v203 = vld [vmem:[%s5 + $0x24] sm:$0xf]
    %v204 = vld [vmem:[%s5 + $0x28] sm:$0xf]
    %v205 = vld [vmem:[%s5 + $0x2c] sm:$0xf]
    %v206 = vld [vmem:[%s5 + $0x30] sm:$0xf]
    %v207 = vld [vmem:[%s5 + $0x34] sm:$0xf]
    %v208 = vld [vmem:[%s5 + $0x38] sm:$0xf]
    %v209 = vld [vmem:[%s5 + $0x3c] sm:$0xf]
    %v210 = vld [vmem:[%s6] sm:$0x1]
    %v212 = vperm.slane %v210, 0
    %v230 = vunpack.c.l.b16 %v194
    %v231 = vunpack.c.l.b16 %v195
    %v232 = vunpack.c.l.b16 %v196
    %v233 = vunpack.c.l.b16 %v197
    %v234 = vunpack.c.l.b16 %v198
    %v235 = vunpack.c.l.b16 %v199
    %v236 = vunpack.c.l.b16 %v200
    %v237 = vunpack.c.l.b16 %v201
    %v238 = vunpack.c.l.b16 %v202
    %v239 = vunpack.c.l.b16 %v203
    %v240 = vunpack.c.l.b16 %v204
    %v241 = vunpack.c.l.b16 %v205
    %v242 = vunpack.c.l.b16 %v206
    %v243 = vunpack.c.l.b16 %v207
    %v244 = vunpack.c.l.b16 %v208
    %v245 = vunpack.c.l.b16 %v209
    %v246 = vpack.c.b16 %v231, %v230
    %v247 = vpack.c.b16 %v233, %v232
    %v248 = vpack.c.b16 %v235, %v234
    %v249 = vpack.c.b16 %v237, %v236
    %v250 = vpack.c.b16 %v239, %v238
    %v251 = vpack.c.b16 %v241, %v240
    %v252 = vpack.c.b16 %v243, %v242
    %v253 = vpack.c.b16 %v245, %v244
    %262 = vmatpush.bf16.msra.mxu0 %v253
    %263 = vmatpush.bf16.msra.mxu0 %v252
    %264 = vmatpush.bf16.msra.mxu0 %v251
    %265 = vmatpush.bf16.msra.mxu0 %v250
    %266 = vmatpush.bf16.msra.mxu0 %v249
    %267 = vmatpush.bf16.msra.mxu0 %v248
    %268 = vmatpush.bf16.msra.mxu0 %v247
    %269 = vmatpush.bf16.msra.mxu0 %v246
    %270 = vmatmul.bf16.gmra.mxu0 %v193
    %v271 = vpop.f32.mrf.mxu0
    %v272 = vadd.f32 %v212, %v271
    %v273 = vpop.f32.mrf.mxu0
    %274 = vdwg.mxu0
    %275 = vmax.xlane.f32.xlu0 %v272
    %v276 = vpop.xlane.xlu0 %275
    %v277 = vsub.f32 %v272, %v276
    %v278 = vmul.f32 %v277, 1.442695
    %v279 = vpow.pop %v278
    %280 = vadd.xlane.f32.xlu0 %v279
    %v281 = vpop.xlane.xlu0 %280
    %v282 = vrcp.pop %v281
    %v283 = vmul.f32 %v279, %v282
    %284 = vst [vmem:[#allocation2] sm:$0xff] %v283
    // Predicated region
    $region30: #{policy_network_forward.1} parent=1 // pred_check
      _
    $region31: #{policy_network_forward.1} parent=1 // pred_check_branch
      %286 = sbr.rel (0) target = $region33
    $region32: #{policy_network_forward.1} parent=1 // pred_region
      %288 = vsyncadd [#allocation3], 0
      %s290 = sshll.u32 [#allocation2], 4
      %s291 = int_to_ptr.vmem [resolvable:$true] %s290
      %s292 = sshll.u32 %s7, 4
      %s293 = int_to_ptr.hbm [resolvable:$true] %s292
      %295 = dma.vmem_to_hbm [thread:$0]  %s291, 128, %s293, [#allocation3]
    $region33: #{policy_network_forward.1} parent=1 // pred_fallthru
      _
    // Predicated region
    $region34: #{policy_network_forward.1} parent=1 // pred_check
      _
    $region35: #{policy_network_forward.1} parent=1 // pred_check_branch
      %297 = sbr.rel (0) target = $region37
    $region36: #{policy_network_forward.1} parent=1 // pred_region
      %299 = dma.done [#allocation3], 128
    $region37: #{policy_network_forward.1} parent=1 // pred_fallthru
      _
    %300 = vsyncpa [#allocation3], 1

</llo_original>
